<compile_context>
chip_gen: v6e
topology: v6e:2x2x1
jax: 0.10.0
libtpu: 0.0.40
codegen_flags: <defaults>
</compile_context>

<pallas_src>
import math

import jax
import jax.numpy as jnp
from jax.experimental import pallas as pl
from jax.experimental.pallas import tpu as pltpu

_HALF_LOG_2PI = 0.5 * math.log(2.0 * math.pi)

_TB_MAX = 1024                    # row-tile cap (multiple of 8); f32 in+out
_VMEM_LIMIT = 32 * 1024 * 1024    # explicit scoped-VMEM limit (safe on v7x too)


# ----------------------------- kernels ------------------------------------ #

def _normal_logpdf_kernel(y_ref, p_ref, out_ref):
    # p_ref rows: [m, 1/sigma, -log(sigma) - 0.5*log(2*pi)]   (param-only glue)
    # log N(y | m, sigma) = -0.5*((y-m)*inv_sigma)^2 + logc
    y = y_ref[...]                      # (TB, L)
    m = p_ref[0:1, :]                   # (1, L) -> broadcast over rows
    inv_sigma = p_ref[1:2, :]
    logc = p_ref[2:3, :]
    z = (y - m) * inv_sigma             # pure VPU: no per-element divide / log
    out_ref[...] = -0.5 * (z * z) + logc


def _beta_logpdf_kernel(y_ref, p_ref, out_ref):
    # p_ref rows: [a-1, b-1, lgamma(a+b)-lgamma(a)-lgamma(b)]  (param-only glue)
    # log Beta(y | a, b) = (a-1)*log(y) + (b-1)*log1p(-y) + lognorm
    y = y_ref[...]                      # (TB, L)
    am1 = p_ref[0:1, :]
    bm1 = p_ref[1:2, :]
    lognorm = p_ref[2:3, :]
    # two transcendentals/element -> EUP is the binding unit for large tiles
    out_ref[...] = am1 * jnp.log(y) + bm1 * jnp.log1p(-y) + lognorm


# --------------------------- pallas wrapper -------------------------------- #

def _lane_dense_width(B, nc):
    """Lane width L for a flattened (R, L) layout, or None if not expressible."""
    total = B * nc
    for L in (1024, 512, 256, 128):
        if total % L == 0 and L % nc == 0:
            return L
    return None


def _call_elementwise(kernel, y, params):
    """Run an elementwise log-pdf kernel on y:(B, nc) with stacked (nc,) params."""
    y = jnp.asarray(y, jnp.float32)
    B, nc = y.shape
    p = jnp.stack([jnp.asarray(q, jnp.float32) for q in params])   # (3, nc)

    L = _lane_dense_width(B, nc)
    if L is not None:
        # Free row-major reshape to a lane-dense slab; params tiled in glue.
        y2 = y.reshape(-1, L)                     # (R, L)
        p2 = jnp.tile(p, (1, L // nc))            # (3, L)
    else:
        # Fallback: keep (B, nc); last dim equals full array dim so it lowers.
        y2, p2 = y, p

    R, Lc = y2.shape
    TB = R if R <= _TB_MAX else _TB_MAX           # full dim, or multiple of 8
    grid = (pl.cdiv(R, TB),)

    y_spec = pl.BlockSpec((TB, Lc), lambda i: (i, 0))
    p_spec = pl.BlockSpec(p2.shape, lambda i: (0, 0))   # resident across grid

    out = pl.pallas_call(
        kernel,
        grid=grid,
        in_specs=[y_spec, p_spec],
        out_specs=y_spec,
        out_shape=jax.ShapeDtypeStruct((R, Lc), jnp.float32),
        compiler_params=pltpu.CompilerParams(
            dimension_semantics=("parallel",),
            vmem_limit_bytes=_VMEM_LIMIT),
    )(y2, p2)
    return out.reshape(B, nc)


# ----------------------------- module ------------------------------------- #

class PropNetwork:
    """JAX/Pallas port of models/props.py::PropNetwork (forward only)."""

    def __init__(self, nc: int, prop_type: str, key=None, eps: float = 1e-6):
        if key is None:
            key = jax.random.PRNGKey(0)
        self.eps = eps
        k1, k2 = jax.random.split(key)
        if prop_type in ("logP", "MW"):
            self.kind = "normal"
            # nn.Parameter(torch.randn(nc)) -> deterministic normal init
            self.m = jax.random.normal(k1, (nc,), jnp.float32)
            self.s = jax.random.normal(k2, (nc,), jnp.float32)
        elif prop_type == "QED":
            self.kind = "beta"
            self.alpha = jax.random.normal(k1, (nc,), jnp.float32)
            self.beta = jax.random.normal(k2, (nc,), jnp.float32)
        else:
            raise ValueError(f"Unknown selected prop {prop_type},")

    def __call__(self, y):
        return self.forward(y)

    def forward(self, y):
        if self.kind == "normal":
            # parameter-only glue ((nc,) sized): softplus, reciprocal, log
            sigma = jax.nn.softplus(self.s) + self.eps
            inv_sigma = 1.0 / sigma
            logc = -jnp.log(sigma) - _HALF_LOG_2PI
            return _call_elementwise(
                _normal_logpdf_kernel, y, (self.m, inv_sigma, logc))
        else:
            # parameter-only glue ((nc,) sized): softplus, lgamma normalizer
            a = jax.nn.softplus(self.alpha) + self.eps
            b = jax.nn.softplus(self.beta) + self.eps
            lognorm = (jax.lax.lgamma(a + b)
                       - jax.lax.lgamma(a)
                       - jax.lax.lgamma(b))
            # TODO(synk): inputs are assumed strictly inside (0,1) as in torch Beta.
            return _call_elementwise(
                _beta_logpdf_kernel, y, (a - 1.0, b - 1.0, lognorm))


# ----------------------------- references --------------------------------- #

def _normal_ref(y, m, s, eps):
    sigma = jax.nn.softplus(s) + eps
    return -0.5 * ((y - m) / sigma) ** 2 - jnp.log(sigma) - _HALF_LOG_2PI


def _beta_ref(y, alpha, beta, eps):
    a = jax.nn.softplus(alpha) + eps
    b = jax.nn.softplus(beta) + eps
    lognorm = jax.lax.lgamma(a + b) - jax.lax.lgamma(a) - jax.lax.lgamma(b)
    return (a - 1.0) * jnp.log(y) + (b - 1.0) * jnp.log1p(-y) + lognorm


# ------------------------------- main -------------------------------------- #

if __name__ == "__main__":
    key = jax.random.PRNGKey(0)
    k_param, k_yn, k_yb, k_yf = jax.random.split(key, 4)

    # --- Normal head ('logP'), lane-dense path (B*nc divisible by 128) ---
    B, nc = 8, 16
    net_normal = PropNetwork(nc, "logP", key=k_param)
    y_normal = jax.random.normal(k_yn, (B, nc), jnp.float32)
    out_n = jax.block_until_ready(net_normal(y_normal))
    ref_n = _normal_ref(y_normal, net_normal.m, net_normal.s, net_normal.eps)
    assert out_n.shape == (B, nc)
    assert jnp.allclose(out_n, ref_n, atol=1e-4, rtol=1e-4)

    # --- Beta head ('QED'), lane-dense path; y must lie in (0, 1) ---
    net_beta = PropNetwork(nc, "QED", key=k_param)
    y_beta = jax.random.uniform(k_yb, (B, nc), jnp.float32,
                                minval=1e-3, maxval=1.0 - 1e-3)
    out_b = jax.block_until_ready(net_beta(y_beta))
    ref_b = _beta_ref(y_beta, net_beta.alpha, net_beta.beta, net_beta.eps)
    assert out_b.shape == (B, nc)
    assert jnp.allclose(out_b, ref_b, atol=1e-4, rtol=1e-4)

    # --- Normal head, fallback (non-lane-dense) path: nc does not divide 128 ---
    Bf, ncf = 10, 12
    net_fallback = PropNetwork(ncf, "MW", key=k_param)
    y_fb = jax.random.normal(k_yf, (Bf, ncf), jnp.float32)
    out_f = jax.block_until_ready(net_fallback(y_fb))
    ref_f = _normal_ref(y_fb, net_fallback.m, net_fallback.s, net_fallback.eps)
    assert out_f.shape == (Bf, ncf)
    assert jnp.allclose(out_f, ref_f, atol=1e-4, rtol=1e-4)

    print("KERNEL_OK")
</pallas_src>

<mosaic_0001>
module attributes {stable_mosaic.version = 11 : i64} {
  func.func @_normal_logpdf_kernel(%arg0: i32, %arg1: memref<1x128xf32, #tpu.memory_space<vmem>>, %arg2: memref<3x128xf32, #tpu.memory_space<vmem>>, %arg3: memref<1x128xf32, #tpu.memory_space<vmem>>) attributes {dimension_semantics = [#tpu.dimension_semantics<parallel>], iteration_bounds = array<i64: 1>, scalar_prefetch = 0 : i64, scratch_operands = 0 : i64, tpu.core_type = #tpu.core_type<tc>, window_params = [{transform_indices = @transform_0, window_bounds = array<i64: 1, 128>}, {pipeline_mode = #tpu.pipeline_mode<synchronous>, transform_indices = @transform_1, window_bounds = array<i64: 3, 128>}, {transform_indices = @transform_2, window_bounds = array<i64: 1, 128>}]} {
    %c0 = arith.constant 0 : index
    %c0_0 = arith.constant 0 : index
    %0 = vector.load %arg1[%c0, %c0_0] : memref<1x128xf32, #tpu.memory_space<vmem>>, vector<1x128xf32>
    %c0_1 = arith.constant 0 : index
    %c0_2 = arith.constant 0 : index
    %1 = vector.load %arg2[%c0_1, %c0_2] : memref<3x128xf32, #tpu.memory_space<vmem>>, vector<1x128xf32>
    %c1 = arith.constant 1 : index
    %c0_3 = arith.constant 0 : index
    %2 = vector.load %arg2[%c1, %c0_3] : memref<3x128xf32, #tpu.memory_space<vmem>>, vector<1x128xf32>
    %c2 = arith.constant 2 : index
    %c0_4 = arith.constant 0 : index
    %3 = vector.load %arg2[%c2, %c0_4] : memref<3x128xf32, #tpu.memory_space<vmem>>, vector<1x128xf32>
    %4 = arith.subf %0, %1 : vector<1x128xf32>
    %5 = arith.mulf %4, %2 : vector<1x128xf32>
    %6 = arith.mulf %5, %5 : vector<1x128xf32>
    %cst = arith.constant -5.000000e-01 : f32
    %7 = vector.broadcast %cst : f32 to vector<1x128xf32>
    %8 = arith.mulf %7, %6 : vector<1x128xf32>
    %9 = arith.addf %8, %3 : vector<1x128xf32>
    %c0_5 = arith.constant 0 : index
    %c0_6 = arith.constant 0 : index
    %10 = vector.load %arg3[%c0_5, %c0_6] : memref<1x128xf32, #tpu.memory_space<vmem>>, vector<1x128xf32>
    tpu.vector_store %arg3[%c0_5, %c0_6], %9 {strides = array<i32>} : memref<1x128xf32, #tpu.memory_space<vmem>>, vector<1x128xf32>,
    return
  }
  func.func @transform_0(%arg0: i32) -> (i32, i32) {
    %c0_i32 = arith.constant 0 : i32
    %c0_i32_0 = arith.constant 0 : i32
    return %arg0, %c0_i32 : i32, i32
  }
  func.func @transform_1(%arg0: i32) -> (i32, i32) {
    %c0_i32 = arith.constant 0 : i32
    %c0_i32_0 = arith.constant 0 : i32
    %c0_i32_1 = arith.constant 0 : i32
    return %c0_i32, %c0_i32_0 : i32, i32
  }
  func.func @transform_2(%arg0: i32) -> (i32, i32) {
    %c0_i32 = arith.constant 0 : i32
    %c0_i32_0 = arith.constant 0 : i32
    return %arg0, %c0_i32 : i32, i32
  }
}

</mosaic_0001>

<llo_original>
// kernel: tpu_custom_call.1
$region0: #{tpu_custom_call.1}
  #allocation0 [shape = 'u32[]', space=smem, size = 0x4, offset = 0x4, fixed_abs, tag = 'smem constant byte address 0x4 - core index']
  #allocation1 [shape = 'u32[144,128]{1,0:T(1,128)}', space=vmem, size = 0x12000, scoped, tag = 'internal scratch']
  %s0 = inlined_call_operand.hbm [shape: f32[1,128], index: 0, kind: input, shape index: {}]
  %s1 = inlined_call_operand.hbm [shape: f32[3,128], index: 1, kind: input, shape index: {}]
  %s2 = inlined_call_operand.hbm [shape: f32[1,128], index: 2, kind: output, shape index: {}]
  %s3 = sld [smem:[#allocation0]]
  $region26: #{tpu_custom_call.1} parent=0
    _
  %s5 = ssub.s32 1, %s3
  %s6 = scalar_select 0, %s5, %s3
  $region1: #{tpu_custom_call.1} parent=0
    #allocation2 [shape = 'u8[512]{0}', space=vmem, size = 0x400, scoped, tag = 'input window, operand 0, single buffered']
    #allocation3 [shape = 's32[1]{0}', space=sflag, size = 0x4, scoped, tag = 'scoped memory for tpu_custom_call.1']
    #allocation4 [shape = 's32[1]{0}', space=sflag, size = 0x4, scoped, tag = 'scoped memory for tpu_custom_call.1']
    #allocation5 [shape = 'u8[2048]{0}', space=vmem, size = 0x800, scoped, tag = 'input window, operand 1, single buffered']
    #allocation6 [shape = 's32[1]{0}', space=sflag, size = 0x4, scoped, tag = 'scoped memory for tpu_custom_call.1']
    #allocation7 [shape = 'u8[512]{0}', space=vmem, size = 0x400, scoped, tag = 'output window, operand 0, single buffered']
    %7 = vsyncpa [#allocation3], 0
    %8 = vsyncpa [#allocation6], 0
    %9 = vsyncpa [#allocation4], 0
    // Predicated region
    $region2: #{tpu_custom_call.1} parent=1 // pred_check
      _
    $region3: #{tpu_custom_call.1} parent=1 // pred_check_branch
      %11 = sbr.rel (0) target = $region5
    $region4: #{tpu_custom_call.1} parent=1 // pred_region
      %s13 = ssub.s32 16, 16
      %14 = vsyncadd [#allocation3], %s13
      %s16 = sshll.u32 [#allocation2], 4
      %s17 = int_to_ptr.vmem [resolvable:$true] %s16
      %19 = dma.hbm_to_vmem [thread:$0]  %s0, 16, %s17, [#allocation3]
    $region5: #{tpu_custom_call.1} parent=1 // pred_fallthru
      _
    // Predicated region
    $region6: #{tpu_custom_call.1} parent=1 // pred_check
      _
    $region7: #{tpu_custom_call.1} parent=1 // pred_check_branch
      %21 = sbr.rel (0) target = $region9
    $region8: #{tpu_custom_call.1} parent=1 // pred_region
      %s23 = ssub.s32 64, 64
      %24 = vsyncadd [#allocation6], %s23
      %s26 = sshll.u32 [#allocation5], 4
      %s27 = int_to_ptr.vmem [resolvable:$true] %s26
      %29 = dma.hbm_to_vmem [thread:$0]  %s1, 64, %s27, [#allocation6]
    $region9: #{tpu_custom_call.1} parent=1 // pred_fallthru
      _
    // Predicated region
    $region10: #{tpu_custom_call.1} parent=1 // pred_check
      _
    $region11: #{tpu_custom_call.1} parent=1 // pred_check_branch
      %31 = sbr.rel (0) target = $region13
    $region12: #{tpu_custom_call.1} parent=1 // pred_region
      %32 = dma.done [#allocation3], 16
    $region13: #{tpu_custom_call.1} parent=1 // pred_fallthru
      _
    // Predicated region
    $region14: #{tpu_custom_call.1} parent=1 // pred_check
      _
    $region15: #{tpu_custom_call.1} parent=1 // pred_check_branch
      %34 = sbr.rel (0) target = $region17
    $region16: #{tpu_custom_call.1} parent=1 // pred_region
      %35 = dma.done [#allocation6], 64
    $region17: #{tpu_custom_call.1} parent=1 // pred_fallthru
      _
    %v36 = vld [vmem:[#allocation2] sm:$0x1]
    %v37 = vld [vmem:[#allocation5] sm:$0x1]
    %v38 = vld [vmem:[#allocation5 + $0x1] sm:$0x1]
    %v39 = vld [vmem:[#allocation5 + $0x2] sm:$0x1]
    %v40 = vsub.f32 %v36, %v37
    %v41 = vmul.f32 %v40, %v38
    %v42 = vmul.f32 %v41, %v41
    %v43 = vmul.f32 %v42, -0.5
    %v44 = vadd.f32 %v43, %v39
    %45 = vst [vmem:[#allocation7] sm:$0x1] %v44
    // Predicated region
    $region18: #{tpu_custom_call.1} parent=1 // pred_check
      _
    $region19: #{tpu_custom_call.1} parent=1 // pred_check_branch
      %47 = sbr.rel (0) target = $region21
    $region20: #{tpu_custom_call.1} parent=1 // pred_region
      %s49 = ssub.s32 16, 16
      %50 = vsyncadd [#allocation4], %s49
      %s52 = sshll.u32 [#allocation7], 4
      %s53 = int_to_ptr.vmem [resolvable:$true] %s52
      %55 = dma.vmem_to_hbm [thread:$0]  %s53, 16, %s2, [#allocation4]
    $region21: #{tpu_custom_call.1} parent=1 // pred_fallthru
      _
    // Predicated region
    $region22: #{tpu_custom_call.1} parent=1 // pred_check
      _
    $region23: #{tpu_custom_call.1} parent=1 // pred_check_branch
      %57 = sbr.rel (0) target = $region25
    $region24: #{tpu_custom_call.1} parent=1 // pred_region
      %58 = dma.done [#allocation4], 16
    $region25: #{tpu_custom_call.1} parent=1 // pred_fallthru
      _
    %59 = vsyncpa [#allocation3], 1
    %60 = vsyncpa [#allocation6], 1
    %61 = vsyncpa [#allocation4], 1

</llo_original>
